<compile_context>
chip_gen: v7x
topology: tpu7x:2x2x1
jax: 0.10.0
libtpu: 0.0.40
codegen_flags: <defaults>
</compile_context>

<pallas_src>
import functools

import jax
import jax.numpy as jnp
from jax import lax
from jax.experimental import pallas as pl
from jax.experimental.pallas import tpu as pltpu

LN_EPS = 1e-5
_INV_SQRT2 = 0.7071067811865476


def _round_up(v, m):
    return (v + m - 1) // m * m


def _erf_approx(z):
    # Abramowitz & Stegun 7.1.26 rational approximation, |err| <= 1.5e-7.
    # Divide goes to the EUP via approx reciprocal; exp also on EUP.
    a1, a2, a3, a4, a5 = (0.254829592, -0.284496736, 1.421413741,
                          -1.453152027, 1.061405429)
    p = 0.3275911
    sign = jnp.where(z >= 0.0, 1.0, -1.0)
    az = jnp.abs(z)
    t = pl.reciprocal(1.0 + p * az, approx=True)
    poly = ((((a5 * t + a4) * t + a3) * t + a2) * t + a1) * t
    return sign * (1.0 - poly * jnp.exp(-az * az))


def _gelu_exact(h):
    # PyTorch nn.GELU() default (approximate='none'): 0.5*x*(1+erf(x/sqrt(2)))
    return 0.5 * h * (1.0 + _erf_approx(h * _INV_SQRT2))


# ----------------------------------------------------------------------------
# Fused kernel. Grid = (row tiles [parallel], hidden tiles [arbitrary]).
# LayerNorm is computed once per row tile (j == 0) into a bf16 scratch; the
# second matmul accumulates into an f32 scratch and writes out on the last j.
# ----------------------------------------------------------------------------
def _ffn_kernel(x_ref, g_ref, be_ref, w1_ref, b1_ref, w2_ref, b2_ref,
                o_ref, xn_ref, acc_ref):
    j = pl.program_id(1)

    @pl.when(j == 0)
    def _():
        x = x_ref[...].astype(jnp.float32)                    # (TM, D)
        inv_d = 1.0 / x.shape[-1]
        mean = jnp.sum(x, axis=-1, keepdims=True) * inv_d
        ex2 = jnp.sum(x * x, axis=-1, keepdims=True) * inv_d
        var = jnp.maximum(ex2 - mean * mean, 0.0)
        xn = (x - mean) * lax.rsqrt(var + LN_EPS)
        xn = xn * g_ref[...].astype(jnp.float32) + be_ref[...].astype(jnp.float32)
        xn_ref[...] = xn.astype(jnp.bfloat16)
        acc_ref[...] = jnp.zeros_like(acc_ref)

    # Linear 1 (MXU: bf16 operands, f32 accumulation) + bias + exact GELU.
    h = jnp.dot(xn_ref[...], w1_ref[...],
                preferred_element_type=jnp.float32)           # (TM, TH)
    h = h + b1_ref[...].astype(jnp.float32)
    h = _gelu_exact(h)

    # Dropout(p=0.0) is the identity -> omitted.

    # Linear 2 partial product back to model dim, accumulated over h-tiles.
    acc_ref[...] += jnp.dot(h.astype(jnp.bfloat16), w2_ref[...],
                            preferred_element_type=jnp.float32)   # (TM, D)

    @pl.when(j == pl.num_programs(1) - 1)
    def _():
        o_ref[...] = (acc_ref[...] + b2_ref[...].astype(jnp.float32)).astype(o_ref.dtype)


# ----------------------------------------------------------------------------
# Tiling heuristics
# ----------------------------------------------------------------------------
def _vmem_limit_bytes():
    try:
        cap = int(pltpu.get_tpu_info().vmem_capacity_bytes)
        # ~112 MiB on 128 MiB parts (v5e/v6e), ~48 MiB on 64 MiB parts (v7x).
        return max(min(cap - 16 * 1024 * 1024, cap * 7 // 8), 16 * 1024 * 1024)
    except Exception:
        return 32 * 1024 * 1024     # conservative, safe on all generations


def _pick_th(D, H, budget_bytes):
    # Both bf16 weights fully resident (single-buffered): 2 * (D*H) * 2 bytes.
    if 4 * D * H <= budget_bytes:
        return H
    th = (H // 128) * 128
    while th >= 128:
        # double-buffered (D,th)+(th,D) bf16 tiles: 2 * 2 * (2*D*th) bytes
        if H % th == 0 and 8 * D * th <= budget_bytes:
            return th
        th -= 128
    # TODO(synk): very large H not divisible into 128-multiples would need a
    # padding-aware hidden tiling; fall back to full H.
    return H


def _pick_tm(M, block_rows, sublane):
    if M <= block_rows:
        return M                                   # single full block, no pad
    t = max((block_rows // sublane) * sublane, sublane)
    while t >= sublane:
        if M % t == 0:
            return t                               # dividing tile -> no pad
        t -= sublane
    return _round_up(min(block_rows, M), sublane)  # fall back to padding


def _make_spec(shape, index_map, buffers):
    """BlockSpec with optional explicit buffer count (feature-gated)."""
    if buffers is not None and hasattr(pl, "Buffered"):
        try:
            return pl.BlockSpec(shape, index_map, pipeline_mode=pl.Buffered(buffers))
        except TypeError:
            pass
    return pl.BlockSpec(shape, index_map)


# ----------------------------------------------------------------------------
# pallas_call wrapper
# ----------------------------------------------------------------------------
@functools.partial(jax.jit,
                   static_argnames=("block_rows", "hidden_block", "use_buffered"))
def _ffn_call(x2, gamma, beta, w1, b1, w2, b2, *,
              block_rows, hidden_block, use_buffered):
    M, D = x2.shape
    H = w1.shape[-1]
    out_dtype = x2.dtype
    xbytes = jnp.dtype(x2.dtype).itemsize
    obytes = jnp.dtype(out_dtype).itemsize

    vmem_limit = _vmem_limit_bytes()

    # Parameters: weights bf16 (halves DMA/VMEM, removes per-step casts);
    # LN params and biases stay f32 (tiny, keep full precision).
    w1 = w1.astype(jnp.bfloat16)
    w2 = w2.astype(jnp.bfloat16)
    gamma = gamma.reshape(1, D).astype(jnp.float32)
    beta = beta.reshape(1, D).astype(jnp.float32)
    b1 = b1.reshape(1, H).astype(jnp.float32)
    b2 = b2.reshape(1, D).astype(jnp.float32)

    # Hidden-dim tiling (second grid axis) only when weights do not fit.
    if hidden_block is not None:
        th = int(hidden_block)
        assert H % th == 0, "hidden_block must divide hidden_dim"
    else:
        th = _pick_th(D, H, vmem_limit // 2)
    n_h = H // th
    w_buffers = 1 if n_h == 1 else 2   # invariant weights -> single buffer

    # Row tiling: dtype-aware sublane multiple; shrink if VMEM budget is tight.
    sublane = max(8, 32 // max(xbytes, 1))   # 8 f32, 16 bf16, 32 int8/fp8

    def _act_bytes(rows):
        # double-buffered x/out tiles + bf16 xn + f32 acc scratch + (rows,th) f32
        return rows * (2 * D * xbytes + 2 * D * obytes + 2 * D + 4 * D + 8 * th)

    w_tile_bytes = w_buffers * 4 * D * th
    br = max(block_rows, sublane)
    while br > sublane and w_tile_bytes + _act_bytes(br) > (vmem_limit * 3) // 4:
        br = max(br // 2, sublane)

    tm = _pick_tm(M, br, sublane)
    mp = _round_up(M, tm)
    if mp != M:
        x2 = jnp.pad(x2, ((0, mp - M), (0, 0)))

    grid = (mp // tm, n_h)

    inv = 1 if use_buffered else None              # invariant operands
    wbuf = w_buffers if use_buffered else None     # weight / b1 operands

    in_specs = [
        _make_spec((tm, D), lambda i, j: (i, 0), None),   # x (row-tiled)
        _make_spec((1, D), lambda i, j: (0, 0), inv),     # LN gamma
        _make_spec((1, D), lambda i, j: (0, 0), inv),     # LN beta
        _make_spec((D, th), lambda i, j: (0, j), wbuf),   # W1 (bf16)
        _make_spec((1, th), lambda i, j: (0, j), wbuf),   # b1
        _make_spec((th, D), lambda i, j: (j, 0), wbuf),   # W2 (bf16)
        _make_spec((1, D), lambda i, j: (0, 0), inv),     # b2
    ]
    out_specs = pl.BlockSpec((tm, D), lambda i, j: (i, 0))

    cost = pl.CostEstimate(
        flops=4 * mp * D * H,
        transcendentals=mp * H,
        bytes_accessed=mp * D * (xbytes + obytes) + 4 * D * H + 4 * (2 * D + H),
    )

    out = pl.pallas_call(
        _ffn_kernel,
        out_shape=jax.ShapeDtypeStruct((mp, D), out_dtype),
        grid=grid,
        in_specs=in_specs,
        out_specs=out_specs,
        scratch_shapes=[
            pltpu.VMEM((tm, D), jnp.bfloat16),   # normalized activations
            pltpu.VMEM((tm, D), jnp.float32),    # output accumulator
        ],
        compiler_params=pltpu.CompilerParams(
            dimension_semantics=("parallel", "arbitrary"),
            vmem_limit_bytes=int(vmem_limit),
        ),
        cost_estimate=cost,
    )(x2, gamma, beta, w1, b1, w2, b2)

    if mp != M:
        out = out[:M]
    return out


def feedforward(x, gamma, beta, w1, b1, w2, b2, *,
                block_rows=512, hidden_block=None):
    """x: (..., D); w1: (D, H); w2: (H, D)."""
    orig_shape = x.shape
    D = x.shape[-1]
    x2 = x.reshape(-1, D)
    args = (x2, gamma, beta, w1, b1, w2, b2)
    try:
        out = _ffn_call(*args, block_rows=block_rows,
                        hidden_block=hidden_block, use_buffered=True)
    except Exception:
        # Fallback if this JAX build rejects explicit pipeline_mode buffering.
        out = _ffn_call(*args, block_rows=block_rows,
                        hidden_block=hidden_block, use_buffered=False)
    return out.reshape(orig_shape)


# ----------------------------------------------------------------------------
# Pure-JAX reference (exact erf GELU) for correctness check.
# ----------------------------------------------------------------------------
def _ref_feedforward(x, gamma, beta, w1, b1, w2, b2):
    mean = jnp.mean(x, axis=-1, keepdims=True)
    var = jnp.mean((x - mean) ** 2, axis=-1, keepdims=True)
    xn = (x - mean) / jnp.sqrt(var + LN_EPS)
    xn = xn * gamma + beta
    h = xn @ w1 + b1
    h = jax.nn.gelu(h, approximate=False)
    return h @ w2 + b2


if __name__ == "__main__":
    # --- Test 1: small shapes, fully-resident single-h-tile path -------------
    batch, seq, dim, hidden_dim = 2, 8, 32, 64
    key = jax.random.PRNGKey(0)
    kx, kg, kb, kw1, kb1, kw2, kb2 = jax.random.split(key, 7)

    x = jax.random.normal(kx, (batch, seq, dim), jnp.float32)
    gamma = 1.0 + 0.1 * jax.random.normal(kg, (dim,), jnp.float32)
    beta = 0.05 * jax.random.normal(kb, (dim,), jnp.float32)
    w1 = 0.1 * jax.random.normal(kw1, (dim, hidden_dim), jnp.float32)
    b1 = 0.01 * jax.random.normal(kb1, (hidden_dim,), jnp.float32)
    w2 = 0.1 * jax.random.normal(kw2, (hidden_dim, dim), jnp.float32)
    b2 = 0.01 * jax.random.normal(kb2, (dim,), jnp.float32)

    out = jax.block_until_ready(feedforward(x, gamma, beta, w1, b1, w2, b2))
    assert out.shape == (batch, seq, dim), out.shape
    ref = jax.block_until_ready(_ref_feedforward(x, gamma, beta, w1, b1, w2, b2))
    assert jnp.allclose(out, ref, atol=2e-2, rtol=2e-2), \
        float(jnp.max(jnp.abs(out - ref)))

    # --- Test 2: exercise the hidden-dim-tiled accumulator path --------------
    b2_, s2_, d2_, h2_ = 2, 64, 256, 512
    k2 = jax.random.PRNGKey(1)
    kx, kg, kb, kw1, kb1, kw2, kb2 = jax.random.split(k2, 7)
    x_l = jax.random.normal(kx, (b2_, s2_, d2_), jnp.float32)
    g_l = 1.0 + 0.1 * jax.random.normal(kg, (d2_,), jnp.float32)
    be_l = 0.05 * jax.random.normal(kb, (d2_,), jnp.float32)
    w1_l = 0.05 * jax.random.normal(kw1, (d2_, h2_), jnp.float32)
    b1_l = 0.01 * jax.random.normal(kb1, (h2_,), jnp.float32)
    w2_l = 0.05 * jax.random.normal(kw2, (h2_, d2_), jnp.float32)
    b2_l = 0.01 * jax.random.normal(kb2, (d2_,), jnp.float32)

    out_l = jax.block_until_ready(
        feedforward(x_l, g_l, be_l, w1_l, b1_l, w2_l, b2_l, hidden_block=256))
    assert out_l.shape == (b2_, s2_, d2_), out_l.shape
    ref_l = jax.block_until_ready(
        _ref_feedforward(x_l, g_l, be_l, w1_l, b1_l, w2_l, b2_l))
    assert jnp.allclose(out_l, ref_l, atol=3e-2, rtol=3e-2), \
        float(jnp.max(jnp.abs(out_l - ref_l)))

    print("KERNEL_OK")
</pallas_src>

<mosaic_0001>
module attributes {stable_mosaic.version = 11 : i64} {
  func.func @_ffn_kernel(%arg0: i32, %arg1: i32, %arg2: memref<16x32xf32, #tpu.memory_space<vmem>>, %arg3: memref<1x32xf32, #tpu.memory_space<vmem>>, %arg4: memref<1x32xf32, #tpu.memory_space<vmem>>, %arg5: memref<32x64xbf16, #tpu.memory_space<vmem>>, %arg6: memref<1x64xf32, #tpu.memory_space<vmem>>, %arg7: memref<64x32xbf16, #tpu.memory_space<vmem>>, %arg8: memref<1x32xf32, #tpu.memory_space<vmem>>, %arg9: memref<16x32xf32, #tpu.memory_space<vmem>>, %arg10: memref<16x32xbf16, #tpu.memory_space<vmem>>, %arg11: memref<16x32xf32, #tpu.memory_space<vmem>>) attributes {dimension_semantics = [#tpu.dimension_semantics<parallel>, #tpu.dimension_semantics<arbitrary>], iteration_bounds = array<i64: 1, 1>, scalar_prefetch = 0 : i64, scratch_operands = 2 : i64, tpu.core_type = #tpu.core_type<tc>, window_params = [{transform_indices = @transform_0, window_bounds = array<i64: 16, 32>}, {pipeline_mode = #tpu.pipeline_mode<synchronous>, transform_indices = @transform_1, window_bounds = array<i64: 1, 32>}, {pipeline_mode = #tpu.pipeline_mode<synchronous>, transform_indices = @transform_2, window_bounds = array<i64: 1, 32>}, {pipeline_mode = #tpu.pipeline_mode<synchronous>, transform_indices = @transform_3, window_bounds = array<i64: 32, 64>}, {pipeline_mode = #tpu.pipeline_mode<synchronous>, transform_indices = @transform_4, window_bounds = array<i64: 1, 64>}, {pipeline_mode = #tpu.pipeline_mode<synchronous>, transform_indices = @transform_5, window_bounds = array<i64: 64, 32>}, {pipeline_mode = #tpu.pipeline_mode<synchronous>, transform_indices = @transform_6, window_bounds = array<i64: 1, 32>}, {transform_indices = @transform_7, window_bounds = array<i64: 16, 32>}]} {
    %c0_i32 = arith.constant 0 : i32
    %0 = arith.cmpi eq, %arg1, %c0_i32 : i32
    %1 = arith.extui %0 : i1 to i32
    %c0_i32_0 = arith.constant 0 : i32
    %2 = arith.cmpi ne, %1, %c0_i32_0 : i32
    scf.if %2 {
      %c0_30 = arith.constant 0 : index
      %c0_31 = arith.constant 0 : index
      %58 = vector.load %arg2[%c0_30, %c0_31] : memref<16x32xf32, #tpu.memory_space<vmem>>, vector<16x32xf32>
      %cst_32 = arith.constant dense<0.000000e+00> : vector<16xf32>
      %59 = vector.multi_reduction <add>, %58, %cst_32 [1] : vector<16x32xf32> to vector<16xf32>
      %60 = vector.shape_cast %59 : vector<16xf32> to vector<16x1xf32>
      %cst_33 = arith.constant 3.125000e-02 : f32
      %61 = vector.broadcast %cst_33 : f32 to vector<16x1xf32>
      %62 = arith.mulf %60, %61 : vector<16x1xf32>
      %63 = arith.mulf %58, %58 : vector<16x32xf32>
      %cst_34 = arith.constant dense<0.000000e+00> : vector<16xf32>
      %64 = vector.multi_reduction <add>, %63, %cst_34 [1] : vector<16x32xf32> to vector<16xf32>
      %65 = vector.shape_cast %64 : vector<16xf32> to vector<16x1xf32>
      %cst_35 = arith.constant 3.125000e-02 : f32
      %66 = vector.broadcast %cst_35 : f32 to vector<16x1xf32>
      %67 = arith.mulf %65, %66 : vector<16x1xf32>
      %68 = arith.mulf %62, %62 : vector<16x1xf32>
      %69 = arith.subf %67, %68 : vector<16x1xf32>
      %cst_36 = arith.constant 0.000000e+00 : f32
      %70 = vector.broadcast %cst_36 : f32 to vector<16x1xf32>
      %71 = arith.maximumf %69, %70 : vector<16x1xf32>
      %72 = vector.broadcast %62 : vector<16x1xf32> to vector<16x32xf32>
      %73 = arith.subf %58, %72 : vector<16x32xf32>
      %cst_37 = arith.constant 9.99999974E-6 : f32
      %74 = vector.broadcast %cst_37 : f32 to vector<16x1xf32>
      %75 = arith.addf %71, %74 : vector<16x1xf32>
      %76 = math.rsqrt %75 : vector<16x1xf32>
      %77 = vector.broadcast %76 : vector<16x1xf32> to vector<16x32xf32>
      %78 = arith.mulf %73, %77 : vector<16x32xf32>
      %c0_38 = arith.constant 0 : index
      %c0_39 = arith.constant 0 : index
      %79 = vector.load %arg3[%c0_38, %c0_39] : memref<1x32xf32, #tpu.memory_space<vmem>>, vector<1x32xf32>
      %80 = vector.broadcast %79 : vector<1x32xf32> to vector<16x32xf32>
      %81 = arith.mulf %78, %80 : vector<16x32xf32>
      %c0_40 = arith.constant 0 : index
      %c0_41 = arith.constant 0 : index
      %82 = vector.load %arg4[%c0_40, %c0_41] : memref<1x32xf32, #tpu.memory_space<vmem>>, vector<1x32xf32>
      %83 = vector.broadcast %82 : vector<1x32xf32> to vector<16x32xf32>
      %84 = arith.addf %81, %83 : vector<16x32xf32>
      %85 = arith.truncf %84 : vector<16x32xf32> to vector<16x32xbf16>
      %c0_42 = arith.constant 0 : index
      %c0_43 = arith.constant 0 : index
      %86 = vector.load %arg10[%c0_42, %c0_43] : memref<16x32xbf16, #tpu.memory_space<vmem>>, vector<16x32xbf16>
      tpu.vector_store %arg10[%c0_42, %c0_43], %85 {strides = array<i32>} : memref<16x32xbf16, #tpu.memory_space<vmem>>, vector<16x32xbf16>,
      %cst_44 = arith.constant 0.000000e+00 : f32
      %87 = vector.broadcast %cst_44 : f32 to vector<16x32xf32>
      %c0_45 = arith.constant 0 : index
      %c0_46 = arith.constant 0 : index
      %88 = vector.load %arg11[%c0_45, %c0_46] : memref<16x32xf32, #tpu.memory_space<vmem>>, vector<16x32xf32>
      tpu.vector_store %arg11[%c0_45, %c0_46], %87 {strides = array<i32>} : memref<16x32xf32, #tpu.memory_space<vmem>>, vector<16x32xf32>,
    } else {
    }
    %c0 = arith.constant 0 : index
    %c0_1 = arith.constant 0 : index
    %3 = vector.load %arg10[%c0, %c0_1] : memref<16x32xbf16, #tpu.memory_space<vmem>>, vector<16x32xbf16>
    %c0_2 = arith.constant 0 : index
    %c0_3 = arith.constant 0 : index
    %4 = vector.load %arg5[%c0_2, %c0_3] : memref<32x64xbf16, #tpu.memory_space<vmem>>, vector<32x64xbf16>
    %cst = arith.constant dense<0.000000e+00> : vector<16x64xf32>
    %5 = tpu.matmul %3, %4, %cst {dimension_numbers = #tpu.dot_dimension_numbers<[1], [0], [0], [1], [0, 0, 1, 1], [], []>} : vector<16x32xbf16>, vector<32x64xbf16>, vector<16x64xf32> -> vector<16x64xf32>
    %c0_4 = arith.constant 0 : index
    %c0_5 = arith.constant 0 : index
    %6 = vector.load %arg6[%c0_4, %c0_5] : memref<1x64xf32, #tpu.memory_space<vmem>>, vector<1x64xf32>
    %7 = vector.broadcast %6 : vector<1x64xf32> to vector<16x64xf32>
    %8 = arith.addf %5, %7 : vector<16x64xf32>
    %cst_6 = arith.constant 5.000000e-01 : f32
    %9 = vector.broadcast %cst_6 : f32 to vector<16x64xf32>
    %10 = arith.mulf %9, %8 : vector<16x64xf32>
    %cst_7 = arith.constant 0.707106769 : f32
    %11 = vector.broadcast %cst_7 : f32 to vector<16x64xf32>
    %12 = arith.mulf %8, %11 : vector<16x64xf32>
    %cst_8 = arith.constant 0.000000e+00 : f32
    %13 = vector.broadcast %cst_8 : f32 to vector<16x64xf32>
    %14 = arith.cmpf oge, %12, %13 : vector<16x64xf32>
    %cst_9 = arith.constant 1.000000e+00 : f32
    %cst_10 = arith.constant -1.000000e+00 : f32
    %15 = vector.broadcast %cst_9 : f32 to vector<16x64xf32>
    %16 = vector.broadcast %cst_10 : f32 to vector<16x64xf32>
    %17 = arith.select %14, %15, %16 : vector<16x64xi1>, vector<16x64xf32>
    %18 = math.absf %12 : vector<16x64xf32>
    %cst_11 = arith.constant 0.327591091 : f32
    %19 = vector.broadcast %cst_11 : f32 to vector<16x64xf32>
    %20 = arith.mulf %19, %18 : vector<16x64xf32>
    %cst_12 = arith.constant 1.000000e+00 : f32
    %21 = vector.broadcast %cst_12 : f32 to vector<16x64xf32>
    %22 = arith.addf %21, %20 : vector<16x64xf32>
    %23 = tpu.reciprocal %22 {approx = true} : vector<16x64xf32> -> vector<16x64xf32>
    %cst_13 = arith.constant 1.06140542 : f32
    %24 = vector.broadcast %cst_13 : f32 to vector<16x64xf32>
    %25 = arith.mulf %24, %23 : vector<16x64xf32>
    %cst_14 = arith.constant -1.45315206 : f32
    %26 = vector.broadcast %cst_14 : f32 to vector<16x64xf32>
    %27 = arith.addf %25, %26 : vector<16x64xf32>
    %28 = arith.mulf %27, %23 : vector<16x64xf32>
    %cst_15 = arith.constant 1.42141378 : f32
    %29 = vector.broadcast %cst_15 : f32 to vector<16x64xf32>
    %30 = arith.addf %28, %29 : vector<16x64xf32>
    %31 = arith.mulf %30, %23 : vector<16x64xf32>
    %cst_16 = arith.constant -0.284496725 : f32
    %32 = vector.broadcast %cst_16 : f32 to vector<16x64xf32>
    %33 = arith.addf %31, %32 : vector<16x64xf32>
    %34 = arith.mulf %33, %23 : vector<16x64xf32>
    %cst_17 = arith.constant 0.254829586 : f32
    %35 = vector.broadcast %cst_17 : f32 to vector<16x64xf32>
    %36 = arith.addf %34, %35 : vector<16x64xf32>
    %37 = arith.mulf %36, %23 : vector<16x64xf32>
    %cst_18 = arith.constant 0.000000e+00 : f32
    %38 = vector.broadcast %cst_18 : f32 to vector<16x64xf32>
    %39 = arith.subf %38, %18 : vector<16x64xf32>
    %40 = arith.mulf %39, %18 : vector<16x64xf32>
    %41 = math.exp %40 : vector<16x64xf32>
    %42 = arith.mulf %37, %41 : vector<16x64xf32>
    %cst_19 = arith.constant 1.000000e+00 : f32
    %43 = vector.broadcast %cst_19 : f32 to vector<16x64xf32>
    %44 = arith.subf %43, %42 : vector<16x64xf32>
    %45 = arith.mulf %17, %44 : vector<16x64xf32>
    %cst_20 = arith.constant 1.000000e+00 : f32
    %46 = vector.broadcast %cst_20 : f32 to vector<16x64xf32>
    %47 = arith.addf %46, %45 : vector<16x64xf32>
    %48 = arith.mulf %10, %47 : vector<16x64xf32>
    %c0_21 = arith.constant 0 : index
    %c0_22 = arith.constant 0 : index
    %49 = vector.load %arg11[%c0_21, %c0_22] : memref<16x32xf32, #tpu.memory_space<vmem>>, vector<16x32xf32>
    %50 = arith.truncf %48 : vector<16x64xf32> to vector<16x64xbf16>
    %c0_23 = arith.constant 0 : index
    %c0_24 = arith.constant 0 : index
    %51 = vector.load %arg7[%c0_23, %c0_24] : memref<64x32xbf16, #tpu.memory_space<vmem>>, vector<64x32xbf16>
    %cst_25 = arith.constant dense<0.000000e+00> : vector<16x32xf32>
    %52 = tpu.matmul %50, %51, %cst_25 {dimension_numbers = #tpu.dot_dimension_numbers<[1], [0], [0], [1], [0, 0, 1, 1], [], []>} : vector<16x64xbf16>, vector<64x32xbf16>, vector<16x32xf32> -> vector<16x32xf32>
    %53 = arith.addf %49, %52 : vector<16x32xf32>
    %c0_26 = arith.constant 0 : index
    %c0_27 = arith.constant 0 : index
    %54 = vector.load %arg11[%c0_26, %c0_27] : memref<16x32xf32, #tpu.memory_space<vmem>>, vector<16x32xf32>
    tpu.vector_store %arg11[%c0_26, %c0_27], %53 {strides = array<i32>} : memref<16x32xf32, #tpu.memory_space<vmem>>, vector<16x32xf32>,
    %c0_i32_28 = arith.constant 0 : i32
    %55 = arith.cmpi eq, %arg1, %c0_i32_28 : i32
    %56 = arith.extui %55 : i1 to i32
    %c0_i32_29 = arith.constant 0 : i32
    %57 = arith.cmpi ne, %56, %c0_i32_29 : i32
    scf.if %57 {
      %c0_30 = arith.constant 0 : index
      %c0_31 = arith.constant 0 : index
      %58 = vector.load %arg11[%c0_30, %c0_31] : memref<16x32xf32, #tpu.memory_space<vmem>>, vector<16x32xf32>
      %c0_32 = arith.constant 0 : index
      %c0_33 = arith.constant 0 : index
      %59 = vector.load %arg8[%c0_32, %c0_33] : memref<1x32xf32, #tpu.memory_space<vmem>>, vector<1x32xf32>
      %60 = vector.broadcast %59 : vector<1x32xf32> to vector<16x32xf32>
      %61 = arith.addf %58, %60 : vector<16x32xf32>
      %c0_34 = arith.constant 0 : index
      %c0_35 = arith.constant 0 : index
      %62 = vector.load %arg9[%c0_34, %c0_35] : memref<16x32xf32, #tpu.memory_space<vmem>>, vector<16x32xf32>
      tpu.vector_store %arg9[%c0_34, %c0_35], %61 {strides = array<i32>} : memref<16x32xf32, #tpu.memory_space<vmem>>, vector<16x32xf32>,
    } else {
    }
    return
  }
  func.func @transform_0(%arg0: i32, %arg1: i32) -> (i32, i32) {
    %c0_i32 = arith.constant 0 : i32
    %c0_i32_0 = arith.constant 0 : i32
    return %arg0, %c0_i32 : i32, i32
  }
  func.func @transform_1(%arg0: i32, %arg1: i32) -> (i32, i32) {
    %c0_i32 = arith.constant 0 : i32
    %c0_i32_0 = arith.constant 0 : i32
    %c0_i32_1 = arith.constant 0 : i32
    return %c0_i32, %c0_i32_0 : i32, i32
  }
  func.func @transform_2(%arg0: i32, %arg1: i32) -> (i32, i32) {
    %c0_i32 = arith.constant 0 : i32
    %c0_i32_0 = arith.constant 0 : i32
    %c0_i32_1 = arith.constant 0 : i32
    return %c0_i32, %c0_i32_0 : i32, i32
  }
  func.func @transform_3(%arg0: i32, %arg1: i32) -> (i32, i32) {
    %c0_i32 = arith.constant 0 : i32
    %c0_i32_0 = arith.constant 0 : i32
    return %c0_i32, %arg1 : i32, i32
  }
  func.func @transform_4(%arg0: i32, %arg1: i32) -> (i32, i32) {
    %c0_i32 = arith.constant 0 : i32
    %c0_i32_0 = arith.constant 0 : i32
    return %c0_i32, %arg1 : i32, i32
  }
  func.func @transform_5(%arg0: i32, %arg1: i32) -> (i32, i32) {
    %c0_i32 = arith.constant 0 : i32
    %c0_i32_0 = arith.constant 0 : i32
    return %arg1, %c0_i32 : i32, i32
  }
  func.func @transform_6(%arg0: i32, %arg1: i32) -> (i32, i32) {
    %c0_i32 = arith.constant 0 : i32
    %c0_i32_0 = arith.constant 0 : i32
    %c0_i32_1 = arith.constant 0 : i32
    return %c0_i32, %c0_i32_0 : i32, i32
  }
  func.func @transform_7(%arg0: i32, %arg1: i32) -> (i32, i32) {
    %c0_i32 = arith.constant 0 : i32
    %c0_i32_0 = arith.constant 0 : i32
    return %arg0, %c0_i32 : i32, i32
  }
}

module attributes {stable_mosaic.version = 11 : i64} {
  func.func @_ffn_kernel(%arg0: i32, %arg1: i32, %arg2: memref<16x32xf32, #tpu.memory_space<vmem>>, %arg3: memref<1x32xf32, #tpu.memory_space<vmem>>, %arg4: memref<1x32xf32, #tpu.memory_space<vmem>>, %arg5: memref<32x64xbf16, #tpu.memory_space<vmem>>, %arg6: memref<1x64xf32, #tpu.memory_space<vmem>>, %arg7: memref<64x32xbf16, #tpu.memory_space<vmem>>, %arg8: memref<1x32xf32, #tpu.memory_space<vmem>>, %arg9: memref<16x32xf32, #tpu.memory_space<vmem>>, %arg10: memref<16x32xbf16, #tpu.memory_space<vmem>>, %arg11: memref<16x32xf32, #tpu.memory_space<vmem>>) attributes {dimension_semantics = [#tpu.dimension_semantics<parallel>, #tpu.dimension_semantics<arbitrary>], iteration_bounds = array<i64: 1, 1>, scalar_prefetch = 0 : i64, scratch_operands = 2 : i64, tpu.core_type = #tpu.core_type<tc>, window_params = [{transform_indices = @transform_0, window_bounds = array<i64: 16, 32>}, {pipeline_mode = #tpu.pipeline_mode<synchronous>, transform_indices = @transform_1, window_bounds = array<i64: 1, 32>}, {pipeline_mode = #tpu.pipeline_mode<synchronous>, transform_indices = @transform_2, window_bounds = array<i64: 1, 32>}, {transform_indices = @transform_3, window_bounds = array<i64: 32, 64>}, {transform_indices = @transform_4, window_bounds = array<i64: 1, 64>}, {transform_indices = @transform_5, window_bounds = array<i64: 64, 32>}, {pipeline_mode = #tpu.pipeline_mode<synchronous>, transform_indices = @transform_6, window_bounds = array<i64: 1, 32>}, {transform_indices = @transform_7, window_bounds = array<i64: 16, 32>}]} {
    %c0_i32 = arith.constant 0 : i32
    %0 = arith.cmpi eq, %arg1, %c0_i32 : i32
    %1 = arith.extui %0 : i1 to i32
    %c0_i32_0 = arith.constant 0 : i32
    %2 = arith.cmpi ne, %1, %c0_i32_0 : i32
    scf.if %2 {
      %c0_30 = arith.constant 0 : index
      %c0_31 = arith.constant 0 : index
      %58 = vector.load %arg2[%c0_30, %c0_31] : memref<16x32xf32, #tpu.memory_space<vmem>>, vector<16x32xf32>
      %cst_32 = arith.constant dense<0.000000e+00> : vector<16xf32>
      %59 = vector.multi_reduction <add>, %58, %cst_32 [1] : vector<16x32xf32> to vector<16xf32>
      %60 = vector.shape_cast %59 : vector<16xf32> to vector<16x1xf32>
      %cst_33 = arith.constant 3.125000e-02 : f32
      %61 = vector.broadcast %cst_33 : f32 to vector<16x1xf32>
      %62 = arith.mulf %60, %61 : vector<16x1xf32>
      %63 = arith.mulf %58, %58 : vector<16x32xf32>
      %cst_34 = arith.constant dense<0.000000e+00> : vector<16xf32>
      %64 = vector.multi_reduction <add>, %63, %cst_34 [1] : vector<16x32xf32> to vector<16xf32>
      %65 = vector.shape_cast %64 : vector<16xf32> to vector<16x1xf32>
      %cst_35 = arith.constant 3.125000e-02 : f32
      %66 = vector.broadcast %cst_35 : f32 to vector<16x1xf32>
      %67 = arith.mulf %65, %66 : vector<16x1xf32>
      %68 = arith.mulf %62, %62 : vector<16x1xf32>
      %69 = arith.subf %67, %68 : vector<16x1xf32>
      %cst_36 = arith.constant 0.000000e+00 : f32
      %70 = vector.broadcast %cst_36 : f32 to vector<16x1xf32>
      %71 = arith.maximumf %69, %70 : vector<16x1xf32>
      %72 = vector.broadcast %62 : vector<16x1xf32> to vector<16x32xf32>
      %73 = arith.subf %58, %72 : vector<16x32xf32>
      %cst_37 = arith.constant 9.99999974E-6 : f32
      %74 = vector.broadcast %cst_37 : f32 to vector<16x1xf32>
      %75 = arith.addf %71, %74 : vector<16x1xf32>
      %76 = math.rsqrt %75 : vector<16x1xf32>
      %77 = vector.broadcast %76 : vector<16x1xf32> to vector<16x32xf32>
      %78 = arith.mulf %73, %77 : vector<16x32xf32>
      %c0_38 = arith.constant 0 : index
      %c0_39 = arith.constant 0 : index
      %79 = vector.load %arg3[%c0_38, %c0_39] : memref<1x32xf32, #tpu.memory_space<vmem>>, vector<1x32xf32>
      %80 = vector.broadcast %79 : vector<1x32xf32> to vector<16x32xf32>
      %81 = arith.mulf %78, %80 : vector<16x32xf32>
      %c0_40 = arith.constant 0 : index
      %c0_41 = arith.constant 0 : index
      %82 = vector.load %arg4[%c0_40, %c0_41] : memref<1x32xf32, #tpu.memory_space<vmem>>, vector<1x32xf32>
      %83 = vector.broadcast %82 : vector<1x32xf32> to vector<16x32xf32>
      %84 = arith.addf %81, %83 : vector<16x32xf32>
      %85 = arith.truncf %84 : vector<16x32xf32> to vector<16x32xbf16>
      %c0_42 = arith.constant 0 : index
      %c0_43 = arith.constant 0 : index
      %86 = vector.load %arg10[%c0_42, %c0_43] : memref<16x32xbf16, #tpu.memory_space<vmem>>, vector<16x32xbf16>
      tpu.vector_store %arg10[%c0_42, %c0_43], %85 {strides = array<i32>} : memref<16x32xbf16, #tpu.memory_space<vmem>>, vector<16x32xbf16>,
      %cst_44 = arith.constant 0.000000e+00 : f32
      %87 = vector.broadcast %cst_44 : f32 to vector<16x32xf32>
      %c0_45 = arith.constant 0 : index
      %c0_46 = arith.constant 0 : index
      %88 = vector.load %arg11[%c0_45, %c0_46] : memref<16x32xf32, #tpu.memory_space<vmem>>, vector<16x32xf32>
      tpu.vector_store %arg11[%c0_45, %c0_46], %87 {strides = array<i32>} : memref<16x32xf32, #tpu.memory_space<vmem>>, vector<16x32xf32>,
    } else {
    }
    %c0 = arith.constant 0 : index
    %c0_1 = arith.constant 0 : index
    %3 = vector.load %arg10[%c0, %c0_1] : memref<16x32xbf16, #tpu.memory_space<vmem>>, vector<16x32xbf16>
    %c0_2 = arith.constant 0 : index
    %c0_3 = arith.constant 0 : index
    %4 = vector.load %arg5[%c0_2, %c0_3] : memref<32x64xbf16, #tpu.memory_space<vmem>>, vector<32x64xbf16>
    %cst = arith.constant dense<0.000000e+00> : vector<16x64xf32>
    %5 = tpu.matmul %3, %4, %cst {dimension_numbers = #tpu.dot_dimension_numbers<[1], [0], [0], [1], [0, 0, 1, 1], [], []>} : vector<16x32xbf16>, vector<32x64xbf16>, vector<16x64xf32> -> vector<16x64xf32>
    %c0_4 = arith.constant 0 : index
    %c0_5 = arith.constant 0 : index
    %6 = vector.load %arg6[%c0_4, %c0_5] : memref<1x64xf32, #tpu.memory_space<vmem>>, vector<1x64xf32>
    %7 = vector.broadcast %6 : vector<1x64xf32> to vector<16x64xf32>
    %8 = arith.addf %5, %7 : vector<16x64xf32>
    %cst_6 = arith.constant 5.000000e-01 : f32
    %9 = vector.broadcast %cst_6 : f32 to vector<16x64xf32>
    %10 = arith.mulf %9, %8 : vector<16x64xf32>
    %cst_7 = arith.constant 0.707106769 : f32
    %11 = vector.broadcast %cst_7 : f32 to vector<16x64xf32>
    %12 = arith.mulf %8, %11 : vector<16x64xf32>
    %cst_8 = arith.constant 0.000000e+00 : f32
    %13 = vector.broadcast %cst_8 : f32 to vector<16x64xf32>
    %14 = arith.cmpf oge, %12, %13 : vector<16x64xf32>
    %cst_9 = arith.constant 1.000000e+00 : f32
    %cst_10 = arith.constant -1.000000e+00 : f32
    %15 = vector.broadcast %cst_9 : f32 to vector<16x64xf32>
    %16 = vector.broadcast %cst_10 : f32 to vector<16x64xf32>
    %17 = arith.select %14, %15, %16 : vector<16x64xi1>, vector<16x64xf32>
    %18 = math.absf %12 : vector<16x64xf32>
    %cst_11 = arith.constant 0.327591091 : f32
    %19 = vector.broadcast %cst_11 : f32 to vector<16x64xf32>
    %20 = arith.mulf %19, %18 : vector<16x64xf32>
    %cst_12 = arith.constant 1.000000e+00 : f32
    %21 = vector.broadcast %cst_12 : f32 to vector<16x64xf32>
    %22 = arith.addf %21, %20 : vector<16x64xf32>
    %23 = tpu.reciprocal %22 {approx = true} : vector<16x64xf32> -> vector<16x64xf32>
    %cst_13 = arith.constant 1.06140542 : f32
    %24 = vector.broadcast %cst_13 : f32 to vector<16x64xf32>
    %25 = arith.mulf %24, %23 : vector<16x64xf32>
    %cst_14 = arith.constant -1.45315206 : f32
    %26 = vector.broadcast %cst_14 : f32 to vector<16x64xf32>
    %27 = arith.addf %25, %26 : vector<16x64xf32>
    %28 = arith.mulf %27, %23 : vector<16x64xf32>
    %cst_15 = arith.constant 1.42141378 : f32
    %29 = vector.broadcast %cst_15 : f32 to vector<16x64xf32>
    %30 = arith.addf %28, %29 : vector<16x64xf32>
    %31 = arith.mulf %30, %23 : vector<16x64xf32>
    %cst_16 = arith.constant -0.284496725 : f32
    %32 = vector.broadcast %cst_16 : f32 to vector<16x64xf32>
    %33 = arith.addf %31, %32 : vector<16x64xf32>
    %34 = arith.mulf %33, %23 : vector<16x64xf32>
    %cst_17 = arith.constant 0.254829586 : f32
    %35 = vector.broadcast %cst_17 : f32 to vector<16x64xf32>
    %36 = arith.addf %34, %35 : vector<16x64xf32>
    %37 = arith.mulf %36, %23 : vector<16x64xf32>
    %cst_18 = arith.constant 0.000000e+00 : f32
    %38 = vector.broadcast %cst_18 : f32 to vector<16x64xf32>
    %39 = arith.subf %38, %18 : vector<16x64xf32>
    %40 = arith.mulf %39, %18 : vector<16x64xf32>
    %41 = math.exp %40 : vector<16x64xf32>
    %42 = arith.mulf %37, %41 : vector<16x64xf32>
    %cst_19 = arith.constant 1.000000e+00 : f32
    %43 = vector.broadcast %cst_19 : f32 to vector<16x64xf32>
    %44 = arith.subf %43, %42 : vector<16x64xf32>
    %45 = arith.mulf %17, %44 : vector<16x64xf32>
    %cst_20 = arith.constant 1.000000e+00 : f32
    %46 = vector.broadcast %cst_20 : f32 to vector<16x64xf32>
    %47 = arith.addf %46, %45 : vector<16x64xf32>
    %48 = arith.mulf %10, %47 : vector<16x64xf32>
    %c0_21 = arith.constant 0 : index
    %c0_22 = arith.constant 0 : index
    %49 = vector.load %arg11[%c0_21, %c0_22] : memref<16x32xf32, #tpu.memory_space<vmem>>, vector<16x32xf32>
    %50 = arith.truncf %48 : vector<16x64xf32> to vector<16x64xbf16>
    %c0_23 = arith.constant 0 : index
    %c0_24 = arith.constant 0 : index
    %51 = vector.load %arg7[%c0_23, %c0_24] : memref<64x32xbf16, #tpu.memory_space<vmem>>, vector<64x32xbf16>
    %cst_25 = arith.constant dense<0.000000e+00> : vector<16x32xf32>
    %52 = tpu.matmul %50, %51, %cst_25 {dimension_numbers = #tpu.dot_dimension_numbers<[1], [0], [0], [1], [0, 0, 1, 1], [], []>} : vector<16x64xbf16>, vector<64x32xbf16>, vector<16x32xf32> -> vector<16x32xf32>
    %53 = arith.addf %49, %52 : vector<16x32xf32>
    %c0_26 = arith.constant 0 : index
    %c0_27 = arith.constant 0 : index
    %54 = vector.load %arg11[%c0_26, %c0_27] : memref<16x32xf32, #tpu.memory_space<vmem>>, vector<16x32xf32>
    tpu.vector_store %arg11[%c0_26, %c0_27], %53 {strides = array<i32>} : memref<16x32xf32, #tpu.memory_space<vmem>>, vector<16x32xf32>,
    %c0_i32_28 = arith.constant 0 : i32
    %55 = arith.cmpi eq, %arg1, %c0_i32_28 : i32
    %56 = arith.extui %55 : i1 to i32
    %c0_i32_29 = arith.constant 0 : i32
    %57 = arith.cmpi ne, %56, %c0_i32_29 : i32
    scf.if %57 {
      %c0_30 = arith.constant 0 : index
      %c0_31 = arith.constant 0 : index
      %58 = vector.load %arg11[%c0_30, %c0_31] : memref<16x32xf32, #tpu.memory_space<vmem>>, vector<16x32xf32>
      %c0_32 = arith.constant 0 : index
      %c0_33 = arith.constant 0 : index
      %59 = vector.load %arg8[%c0_32, %c0_33] : memref<1x32xf32, #tpu.memory_space<vmem>>, vector<1x32xf32>
      %60 = vector.broadcast %59 : vector<1x32xf32> to vector<16x32xf32>
      %61 = arith.addf %58, %60 : vector<16x32xf32>
      %c0_34 = arith.constant 0 : index
      %c0_35 = arith.constant 0 : index
      %62 = vector.load %arg9[%c0_34, %c0_35] : memref<16x32xf32, #tpu.memory_space<vmem>>, vector<16x32xf32>
      tpu.vector_store %arg9[%c0_34, %c0_35], %61 {strides = array<i32>} : memref<16x32xf32, #tpu.memory_space<vmem>>, vector<16x32xf32>,
    } else {
    }
    return
  }
  func.func @transform_0(%arg0: i32, %arg1: i32) -> (i32, i32) {
    %c0_i32 = arith.constant 0 : i32
    %c0_i32_0 = arith.constant 0 : i32
    return %arg0, %c0_i32 : i32, i32
  }
  func.func @transform_1(%arg0: i32, %arg1: i32) -> (i32, i32) {
    %c0_i32 = arith.constant 0 : i32
    %c0_i32_0 = arith.constant 0 : i32
    %c0_i32_1 = arith.constant 0 : i32
    return %c0_i32, %c0_i32_0 : i32, i32
  }
  func.func @transform_2(%arg0: i32, %arg1: i32) -> (i32, i32) {
    %c0_i32 = arith.constant 0 : i32
    %c0_i32_0 = arith.constant 0 : i32
    %c0_i32_1 = arith.constant 0 : i32
    return %c0_i32, %c0_i32_0 : i32, i32
  }
  func.func @transform_3(%arg0: i32, %arg1: i32) -> (i32, i32) {
    %c0_i32 = arith.constant 0 : i32
    %c0_i32_0 = arith.constant 0 : i32
    return %c0_i32, %arg1 : i32, i32
  }
  func.func @transform_4(%arg0: i32, %arg1: i32) -> (i32, i32) {
    %c0_i32 = arith.constant 0 : i32
    %c0_i32_0 = arith.constant 0 : i32
    return %c0_i32, %arg1 : i32, i32
  }
  func.func @transform_5(%arg0: i32, %arg1: i32) -> (i32, i32) {
    %c0_i32 = arith.constant 0 : i32
    %c0_i32_0 = arith.constant 0 : i32
    return %arg1, %c0_i32 : i32, i32
  }
  func.func @transform_6(%arg0: i32, %arg1: i32) -> (i32, i32) {
    %c0_i32 = arith.constant 0 : i32
    %c0_i32_0 = arith.constant 0 : i32
    %c0_i32_1 = arith.constant 0 : i32
    return %c0_i32, %c0_i32_0 : i32, i32
  }
  func.func @transform_7(%arg0: i32, %arg1: i32) -> (i32, i32) {
    %c0_i32 = arith.constant 0 : i32
    %c0_i32_0 = arith.constant 0 : i32
    return %arg0, %c0_i32 : i32, i32
  }
}

</mosaic_0001>

<llo_original>
// kernel: _ffn_call.1
$region0: #{_ffn_call.1}
  #allocation0 [shape = 'u32[]', space=smem, size = 0x4, offset = 0x4, fixed_abs, tag = 'smem constant byte address 0x4 - core index']
  #allocation1 [shape = 'u32[144,128]{1,0:T(1,128)}', space=vmem, size = 0x12000, scoped, tag = 'internal scratch']
  #allocation2 [shape = 'bf16[16,32]{1,0:T(16,128)(2,1)}', space=vmem, size = 0x1000, scoped, tag = 'scratch operand']
  #allocation3 [shape = 'f32[16,32]{1,0:T(8,128)}', space=vmem, size = 0x2000, scoped, tag = 'scratch operand']
  %s0 = inlined_call_operand.vmem [shape: f32[16,32], index: 0, kind: input, shape index: {}]
  %s1 = inlined_call_operand.vmem [shape: f32[1,32], index: 1, kind: input, shape index: {}]
  %s2 = inlined_call_operand.vmem [shape: f32[1,32], index: 2, kind: input, shape index: {}]
  %s3 = inlined_call_operand.vmem [shape: bf16[32,64], index: 3, kind: input, shape index: {}]
  %s4 = inlined_call_operand.vmem [shape: f32[1,64], index: 4, kind: input, shape index: {}]
  %s5 = inlined_call_operand.vmem [shape: bf16[64,32], index: 5, kind: input, shape index: {}]
  %s6 = inlined_call_operand.vmem [shape: f32[1,32], index: 6, kind: input, shape index: {}]
  %s7 = inlined_call_operand.hbm [shape: f32[16,32], index: 7, kind: output, shape index: {}]
  %s8 = sld [smem:[#allocation0]]
  $region46: #{_ffn_call.1} parent=0
    _
  %s10 = ssub.s32 1, %s8
  %s11 = scalar_select 0, %s10, %s8
  $region1: #{_ffn_call.1} parent=0
    #allocation4 [shape = 'u8[8192]{0}', space=vmem, size = 0x2000, scoped, tag = 'output window, operand 0, single buffered']
    #allocation5 [shape = 's32[1]{0}', space=sflag, size = 0x4, scoped, tag = 'scoped memory for _ffn_call.1']
    %12 = vsyncpa [#allocation5], 0
    // Predicated region
    $region2: #{_ffn_call.1} parent=1 // pred_check
      _
    $region3: #{_ffn_call.1} parent=1 // pred_check_branch
      %14 = sbr.rel (0) target = $region5
    $region4: #{_ffn_call.1} parent=1 // pred_region
      _
    $region5: #{_ffn_call.1} parent=1 // pred_fallthru
      _
    // Predicated region
    $region6: #{_ffn_call.1} parent=1 // pred_check
      _
    $region7: #{_ffn_call.1} parent=1 // pred_check_branch
      %16 = sbr.rel (0) target = $region9
    $region8: #{_ffn_call.1} parent=1 // pred_region
      _
    $region9: #{_ffn_call.1} parent=1 // pred_fallthru
      _
    // Predicated region
    $region10: #{_ffn_call.1} parent=1 // pred_check
      _
    $region11: #{_ffn_call.1} parent=1 // pred_check_branch
      %18 = sbr.rel (0) target = $region13
    $region12: #{_ffn_call.1} parent=1 // pred_region
      _
    $region13: #{_ffn_call.1} parent=1 // pred_fallthru
      _
    // Predicated region
    $region14: #{_ffn_call.1} parent=1 // pred_check
      _
    $region15: #{_ffn_call.1} parent=1 // pred_check_branch
      %20 = sbr.rel (0) target = $region17
    $region16: #{_ffn_call.1} parent=1 // pred_region
      _
    $region17: #{_ffn_call.1} parent=1 // pred_fallthru
      _
    // Predicated region
    $region18: #{_ffn_call.1} parent=1 // pred_check
      _
    $region19: #{_ffn_call.1} parent=1 // pred_check_branch
      %22 = sbr.rel (0) target = $region21
    $region20: #{_ffn_call.1} parent=1 // pred_region
      _
    $region21: #{_ffn_call.1} parent=1 // pred_fallthru
      _
    // Predicated region
    $region22: #{_ffn_call.1} parent=1 // pred_check
      _
    $region23: #{_ffn_call.1} parent=1 // pred_check_branch
      %24 = sbr.rel (0) target = $region25
    $region24: #{_ffn_call.1} parent=1 // pred_region
      _
    $region25: #{_ffn_call.1} parent=1 // pred_fallthru
      _
    // Predicated region
    $region26: #{_ffn_call.1} parent=1 // pred_check
      _
    $region27: #{_ffn_call.1} parent=1 // pred_check_branch
      %26 = sbr.rel (0) target = $region29
    $region28: #{_ffn_call.1} parent=1 // pred_region
      _
    $region29: #{_ffn_call.1} parent=1 // pred_fallthru
      _
    %p28 = scmp.eq.s32.totalorder 0, 0
    // Predicated region
    $region30: #{_ffn_call.1} parent=1 // pred_check
      %p29 = pneg %p28
    $region31: #{_ffn_call.1} parent=1 // pred_check_branch
      %31 = sbr.rel (%p29) target = $region33
    $region32: #{_ffn_call.1} parent=1 // pred_region
      %v32 = vld [vmem:[%s0] sm:$0xff]
      %v33 = vld [vmem:[%s0 + $0x8] sm:$0xff]
      %vm34 = vcmask 261120
      %v35 = vsel %vm34, %v32, 0.0
      %36 = vadd.xlane.f32.xlu0 %v35
      %v37 = vpop.xlane.xlu0 %36
      %v38 = vsel %vm34, %v33, 0.0
      %39 = vadd.xlane.f32.xlu0 %v38
      %v40 = vpop.xlane.xlu0 %39
      %v41 = vmul.f32 %v37, 0.03125
      %v42 = vmul.f32 %v40, 0.03125
      %v43 = vmul.f32 %v32, %v32
      %v44 = vmul.f32 %v33, %v33
      %v45 = vsel %vm34, %v43, 0.0
      %46 = vadd.xlane.f32.xlu0 %v45
      %v47 = vpop.xlane.xlu0 %46
      %v48 = vsel %vm34, %v44, 0.0
      %49 = vadd.xlane.f32.xlu0 %v48
      %v50 = vpop.xlane.xlu0 %49
      %v51 = vmul.f32 %v47, 0.03125
      %v52 = vmul.f32 %v50, 0.03125
      %v53 = vmul.f32 %v41, %v41
      %v54 = vmul.f32 %v42, %v42
      %v55 = vsub.f32 %v51, %v53
      %v56 = vsub.f32 %v52, %v54
      %v57 = vmax.f32 %v55, 0.0
      %v58 = vmax.f32 %v56, 0.0
      %v59 = vsub.f32 %v32, %v41
      %v60 = vsub.f32 %v33, %v42
      %v61 = vadd.f32 %v57, 1e-05
      %v62 = vadd.f32 %v58, 1e-05
      %v63 = vrsqrt.pop %v61
      %v64 = vrsqrt.pop %v62
      %v65 = vmul.f32 %v59, %v63
      %v66 = vmul.f32 %v60, %v64
      %v67 = vld [vmem:[%s1] sm:$0x1]
      %v69 = vlaneseq
      %v70 = vshrl.u32 %v69, 7
      %v71 = vsub.s32 0, %v70
      %v72 = vrot.slane %v67, %v71
      %v74 = vmul.f32 %v65, %v72
      %v75 = vmul.f32 %v66, %v72
      %v76 = vld [vmem:[%s2] sm:$0x1]
      %v78 = vlaneseq
      %v79 = vshrl.u32 %v78, 7
      %v80 = vsub.s32 0, %v79
      %v81 = vrot.slane %v76, %v80
      %v83 = vadd.f32 %v74, %v81
      %v84 = vadd.f32 %v75, %v81
      %v85 = vpack.c.bf16 %v84, %v83
      %86 = vst.msk [vmem:[#allocation2] sm:$0xff] %vm34, %v85
      %87 = vst.msk [vmem:[#allocation3] sm:$0xff] %vm34, 0.0
      %88 = vst.msk [vmem:[#allocation3 + $0x8] sm:$0xff] %vm34, 0.0
    $region33: #{_ffn_call.1} parent=1 // pred_fallthru
      _
    %v89 = vld [vmem:[#allocation2] sm:$0xff]
    %v90 = vld [vmem:[%s3] sm:$0xf]
    %v91 = vld [vmem:[%s3 + $0x4] sm:$0xf]
    %v92 = vld [vmem:[%s3 + $0x8] sm:$0xf]
    %v93 = vld [vmem:[%s3 + $0xc] sm:$0xf]
    %v94 = vld [vmem:[%s4] sm:$0x1]
    %v96 = vlaneseq
    %v97 = vshrl.u32 %v96, 7
    %v98 = vsub.s32 0, %v97
    %v99 = vrot.slane %v94, %v98
    %v105 = vunpack.c.l.b16 %v90
    %v106 = vunpack.c.l.b16 %v91
    %v107 = vunpack.c.l.b16 %v92
    %v108 = vunpack.c.l.b16 %v93
    %v109 = vpack.c.b16 %v106, %v105
    %v110 = vpack.c.b16 %v108, %v107
    %vm113 = vcmask 261120
    %v115 = vsel %vm113, %v89, 0
    %117 = vmatprep.subr.bf16.mxu0 0
    %118 = vmatpush1.bf16.msra.mxu0 %v109
    %119 = vmatprep.subr.bf16.mxu0 0
    %120 = vmatpush1.bf16.msra.mxu0 %v110
    %121 = vmatprep.subr.bf16.mxu0 0
    %122 = vmatpush1.bf16.msra.mxu0 0
    %123 = vmatprep.subr.bf16.mxu0 0
    %124 = vmatpush1.bf16.msra.mxu0 0
    %125 = vmatprep.subr.bf16.mxu0 0
    %126 = vmatpush1.bf16.msra.mxu0 0
    %127 = vmatprep.subr.bf16.mxu0 0
    %128 = vmatpush1.bf16.msra.mxu0 0
    %129 = vmatprep.subr.bf16.mxu0 0
    %130 = vmatpush1.bf16.msra.mxu0 0
    %131 = vmatprep.subr.bf16.mxu0 0
    %132 = vmatpush1.bf16.msra.mxu0 0
    %133 = vmatprep.subr.bf16.mxu0 0
    %134 = vmatpush1.bf16.msra.mxu0 0
    %135 = vmatprep.subr.bf16.mxu0 0
    %136 = vmatpush1.bf16.msra.mxu0 0
    %137 = vmatprep.subr.bf16.mxu0 0
    %138 = vmatpush1.bf16.msra.mxu0 0
    %139 = vmatprep.subr.bf16.mxu0 0
    %140 = vmatpush1.bf16.msra.mxu0 0
    %141 = vmatprep.subr.bf16.mxu0 0
    %142 = vmatpush1.bf16.msra.mxu0 0
    %143 = vmatprep.subr.bf16.mxu0 0
    %144 = vmatpush1.bf16.msra.mxu0 0
    %145 = vmatprep.subr.bf16.mxu0 0
    %146 = vmatpush1.bf16.msra.mxu0 0
    %147 = vmatprep.subr.bf16.mxu0 0
    %148 = vmatpush1.bf16.msra.mxu0 0
    %149 = vmatprep.mubr.bf16.mxu0 0
    %150 = vmatmul.mubr.bf16.gmra.mrb[0].mxu0 %v115
    %v151 = vpop.f32.mrb[0].mxu0
    %v152 = vadd.f32 %v99, %v151
    %v153 = vpop.f32.mrb[0].mxu0
    %v154 = vpop.f32.mrb[0].mxu0
    %v155 = vadd.f32 %v99, %v154
    %v156 = vpop.f32.mrb[0].mxu0
    %157 = vdwg.mxu0
    %v158 = vmul.f32 %v152, 0.5
    %v159 = vmul.f32 %v155, 0.5
    %v160 = vmul.f32 %v152, 0.70710677
    %v161 = vmul.f32 %v155, 0.70710677
    %vm162 = vcmp.ge.f32.partialorder %v160, 0.0
    %vm163 = vcmp.ge.f32.partialorder %v161, 0.0
    %v164 = vsel %vm162, 1.0, -1.0
    %v165 = vsel %vm163, 1.0, -1.0
    %v166 = vand.u32 2147483647, %v160
    %v167 = vand.u32 2147483647, %v161
    %v168 = vmul.f32 %v166, 0.3275911
    %v169 = vmul.f32 %v167, 0.3275911
    %v170 = vadd.f32 %v168, 1.0
    %v171 = vadd.f32 %v169, 1.0
    %v172 = vrcp.pop %v170
    %v173 = vrcp.pop %v171
    %v174 = vmul.f32 %v172, 1.0614054
    %v175 = vmul.f32 %v173, 1.0614054
    %v176 = vadd.f32 %v174, -1.4531521
    %v177 = vadd.f32 %v175, -1.4531521
    %v178 = vmul.f32 %v176, %v172
    %v179 = vmul.f32 %v177, %v173
    %v180 = vadd.f32 %v178, 1.4214138
    %v181 = vadd.f32 %v179, 1.4214138
    %v182 = vmul.f32 %v180, %v172
    %v183 = vmul.f32 %v181, %v173
    %v184 = vadd.f32 %v182, -0.28449672
    %v185 = vadd.f32 %v183, -0.28449672
    %v186 = vmul.f32 %v184, %v172
    %v187 = vmul.f32 %v185, %v173
    %v188 = vadd.f32 %v186, 0.2548296
    %v189 = vadd.f32 %v187, 0.2548296
    %v190 = vmul.f32 %v188, %v172
    %v191 = vmul.f32 %v189, %v173
    %v192 = vsub.f32 0.0, %v166
    %v193 = vsub.f32 0.0, %v167
    %v194 = vmul.f32 %v192, %v166
    %v195 = vmul.f32 %v193, %v167
    %v196 = vmul.f32 %v194, 1.442695
    %v197 = vpow.pop %v196
    %v198 = vmul.f32 %v195, 1.442695
    %v199 = vpow.pop %v198
    %v200 = vmul.f32 %v190, %v197
    %v201 = vmul.f32 %v191, %v199
    %v202 = vsub.f32 1.0, %v200
    %v203 = vsub.f32 1.0, %v201
    %v204 = vmul.f32 %v164, %v202
    %v205 = vmul.f32 %v165, %v203
    %v206 = vadd.f32 %v204, 1.0
    %v207 = vadd.f32 %v205, 1.0
    %v208 = vmul.f32 %v158, %v206
    %v209 = vmul.f32 %v159, %v207
    %v210 = vld [vmem:[#allocation3] sm:$0xff]
    %v211 = vld [vmem:[#allocation3 + $0x8] sm:$0xff]
    %v212 = vpack.c.bf16 %v209, %v208
    %v213 = vld [vmem:[%s5] sm:$0xf]
    %v214 = vld [vmem:[%s5 + $0x4] sm:$0xf]
    %v215 = vld [vmem:[%s5 + $0x8] sm:$0xf]
    %v216 = vld [vmem:[%s5 + $0xc] sm:$0xf]
    %v217 = vld [vmem:[%s5 + $0x10] sm:$0xf]
    %v218 = vld [vmem:[%s5 + $0x14] sm:$0xf]
    %v219 = vld [vmem:[%s5 + $0x18] sm:$0xf]
    %v220 = vld [vmem:[%s5 + $0x1c] sm:$0xf]
    %v229 = vunpack.c.l.b16 %v213
    %v230 = vunpack.c.l.b16 %v214
    %v231 = vunpack.c.l.b16 %v215
    %v232 = vunpack.c.l.b16 %v216
    %v233 = vunpack.c.l.b16 %v217
    %v234 = vunpack.c.l.b16 %v218
    %v235 = vunpack.c.l.b16 %v219
    %v236 = vunpack.c.l.b16 %v220
    %v237 = vpack.c.b16 %v230, %v229
    %v238 = vpack.c.b16 %v232, %v231
    %v239 = vpack.c.b16 %v234, %v233
    %v240 = vpack.c.b16 %v236, %v235
    %vm245 = vcmask 523264
    %v247 = vsel %vm245, %v212, 0
    %249 = vmatprep.subr.bf16.mxu0 0
    %250 = vmatpush1.bf16.msra.mxu0 %v237
    %251 = vmatprep.subr.bf16.mxu0 0
    %252 = vmatpush1.bf16.msra.mxu0 %v238
    %253 = vmatprep.subr.bf16.mxu0 0
    %254 = vmatpush1.bf16.msra.mxu0 %v239
    %255 = vmatprep.subr.bf16.mxu0 0
    %256 = vmatpush1.bf16.msra.mxu0 %v240
    %257 = vmatprep.subr.bf16.mxu0 0
    %258 = vmatpush1.bf16.msra.mxu0 0
    %259 = vmatprep.subr.bf16.mxu0 0
    %260 = vmatpush1.bf16.msra.mxu0 0
    %261 = vmatprep.subr.bf16.mxu0 0
    %262 = vmatpush1.bf16.msra.mxu0 0
    %263 = vmatprep.subr.bf16.mxu0 0
    %264 = vmatpush1.bf16.msra.mxu0 0
    %265 = vmatprep.subr.bf16.mxu0 0
    %266 = vmatpush1.bf16.msra.mxu0 0
    %267 = vmatprep.subr.bf16.mxu0 0
    %268 = vmatpush1.bf16.msra.mxu0 0
    %269 = vmatprep.subr.bf16.mxu0 0
    %270 = vmatpush1.bf16.msra.mxu0 0
    %271 = vmatprep.subr.bf16.mxu0 0
    %272 = vmatpush1.bf16.msra.mxu0 0
    %273 = vmatprep.subr.bf16.mxu0 0
    %274 = vmatpush1.bf16.msra.mxu0 0
    %275 = vmatprep.subr.bf16.mxu0 0
    %276 = vmatpush1.bf16.msra.mxu0 0
    %277 = vmatprep.subr.bf16.mxu0 0
    %278 = vmatpush1.bf16.msra.mxu0 0
    %279 = vmatprep.subr.bf16.mxu0 0
    %280 = vmatpush1.bf16.msra.mxu0 0
    %281 = vmatprep.mubr.bf16.mxu0 0
    %282 = vmatmul.mubr.bf16.gmra.mrb[0].mxu0 %v247
    %v283 = vpop.f32.mrb[0].mxu0
    %v284 = vadd.f32 0.0, %v283
    %v285 = vpop.f32.mrb[0].mxu0
    %v286 = vpop.f32.mrb[0].mxu0
    %v287 = vadd.f32 0.0, %v286
    %v288 = vpop.f32.mrb[0].mxu0
    %289 = vdwg.mxu0
    %v290 = vadd.f32 %v210, %v284
    %v291 = vadd.f32 %v211, %v287
    %292 = vst.msk [vmem:[#allocation3] sm:$0xff] %vm113, %v290
    %293 = vst.msk [vmem:[#allocation3 + $0x8] sm:$0xff] %vm113, %v291
    // Predicated region
    $region34: #{_ffn_call.1} parent=1 // pred_check
      %p294 = pneg %p28
    $region35: #{_ffn_call.1} parent=1 // pred_check_branch
      %296 = sbr.rel (%p294) target = $region37
    $region36: #{_ffn_call.1} parent=1 // pred_region
      %v297 = vld [vmem:[#allocation3] sm:$0xff]
      %v298 = vld [vmem:[#allocation3 + $0x8] sm:$0xff]
      %v299 = vld [vmem:[%s6] sm:$0x1]
      %v301 = vlaneseq
      %v302 = vshrl.u32 %v301, 7
      %v303 = vsub.s32 0, %v302
      %v304 = vrot.slane %v299, %v303
      %v306 = vadd.f32 %v297, %v304
      %v307 = vadd.f32 %v298, %v304
      %308 = vst.msk [vmem:[#allocation4] sm:$0xff] %vm113, %v306
      %309 = vst.msk [vmem:[#allocation4 + $0x8] sm:$0xff] %vm113, %v307
    $region37: #{_ffn_call.1} parent=1 // pred_fallthru
      _
    // Predicated region
    $region38: #{_ffn_call.1} parent=1 // pred_check
      _
    $region39: #{_ffn_call.1} parent=1 // pred_check_branch
      %311 = sbr.rel (0) target = $region41
    $region40: #{_ffn_call.1} parent=1 // pred_region
      %s313 = ssub.s32 256, 256
      %314 = vsyncadd [#allocation5], %s313
      %s315 = sshll.u32 [#allocation4], 4
      %s316 = int_to_ptr.vmem [resolvable:$true] %s315
      %321 = dma.vmem_to_hbm [thread:$0]  %s316, 256, %s7, [#allocation5], 128, 128, 8
    $region41: #{_ffn_call.1} parent=1 // pred_fallthru
      _
    // Predicated region
    $region42: #{_ffn_call.1} parent=1 // pred_check
      _
    $region43: #{_ffn_call.1} parent=1 // pred_check_branch
      %323 = sbr.rel (0) target = $region45
    $region44: #{_ffn_call.1} parent=1 // pred_region
      %324 = dma.done [#allocation5], 256
    $region45: #{_ffn_call.1} parent=1 // pred_fallthru
      _
    %325 = vsyncpa [#allocation5], 1

// kernel: _ffn_call.1
$region0: #{_ffn_call.1}
  #allocation0 [shape = 'u32[]', space=smem, size = 0x4, offset = 0x4, fixed_abs, tag = 'smem constant byte address 0x4 - core index']
  #allocation1 [shape = 'u32[144,128]{1,0:T(1,128)}', space=vmem, size = 0x12000, scoped, tag = 'internal scratch']
  #allocation2 [shape = 'bf16[16,32]{1,0:T(16,128)(2,1)}', space=vmem, size = 0x1000, scoped, tag = 'scratch operand']
  #allocation3 [shape = 'f32[16,32]{1,0:T(8,128)}', space=vmem, size = 0x2000, scoped, tag = 'scratch operand']
  %s0 = inlined_call_operand.vmem [shape: f32[16,32], index: 0, kind: input, shape index: {}]
  %s1 = inlined_call_operand.vmem [shape: f32[1,32], index: 1, kind: input, shape index: {}]
  %s2 = inlined_call_operand.vmem [shape: f32[1,32], index: 2, kind: input, shape index: {}]
  %s3 = inlined_call_operand.vmem [shape: bf16[32,64], index: 3, kind: input, shape index: {}]
  %s4 = inlined_call_operand.vmem [shape: f32[1,64], index: 4, kind: input, shape index: {}]
  %s5 = inlined_call_operand.vmem [shape: bf16[64,32], index: 5, kind: input, shape index: {}]
  %s6 = inlined_call_operand.vmem [shape: f32[1,32], index: 6, kind: input, shape index: {}]
  %s7 = inlined_call_operand.hbm [shape: f32[16,32], index: 7, kind: output, shape index: {}]
  %s8 = sld [smem:[#allocation0]]
  $region46: #{_ffn_call.1} parent=0
    _
  %s10 = ssub.s32 1, %s8
  %s11 = scalar_select 0, %s10, %s8
  $region1: #{_ffn_call.1} parent=0
    #allocation4 [shape = 'u8[8192]{0}', space=vmem, size = 0x2000, scoped, tag = 'output window, operand 0, single buffered']
    #allocation5 [shape = 's32[1]{0}', space=sflag, size = 0x4, scoped, tag = 'scoped memory for _ffn_call.1']
    %12 = vsyncpa [#allocation5], 0
    // Predicated region
    $region2: #{_ffn_call.1} parent=1 // pred_check
      _
    $region3: #{_ffn_call.1} parent=1 // pred_check_branch
      %14 = sbr.rel (0) target = $region5
    $region4: #{_ffn_call.1} parent=1 // pred_region
      _
    $region5: #{_ffn_call.1} parent=1 // pred_fallthru
      _
    // Predicated region
    $region6: #{_ffn_call.1} parent=1 // pred_check
      _
    $region7: #{_ffn_call.1} parent=1 // pred_check_branch
      %16 = sbr.rel (0) target = $region9
    $region8: #{_ffn_call.1} parent=1 // pred_region
      _
    $region9: #{_ffn_call.1} parent=1 // pred_fallthru
      _
    // Predicated region
    $region10: #{_ffn_call.1} parent=1 // pred_check
      _
    $region11: #{_ffn_call.1} parent=1 // pred_check_branch
      %18 = sbr.rel (0) target = $region13
    $region12: #{_ffn_call.1} parent=1 // pred_region
      _
    $region13: #{_ffn_call.1} parent=1 // pred_fallthru
      _
    // Predicated region
    $region14: #{_ffn_call.1} parent=1 // pred_check
      _
    $region15: #{_ffn_call.1} parent=1 // pred_check_branch
      %20 = sbr.rel (0) target = $region17
    $region16: #{_ffn_call.1} parent=1 // pred_region
      _
    $region17: #{_ffn_call.1} parent=1 // pred_fallthru
      _
    // Predicated region
    $region18: #{_ffn_call.1} parent=1 // pred_check
      _
    $region19: #{_ffn_call.1} parent=1 // pred_check_branch
      %22 = sbr.rel (0) target = $region21
    $region20: #{_ffn_call.1} parent=1 // pred_region
      _
    $region21: #{_ffn_call.1} parent=1 // pred_fallthru
      _
    // Predicated region
    $region22: #{_ffn_call.1} parent=1 // pred_check
      _
    $region23: #{_ffn_call.1} parent=1 // pred_check_branch
      %24 = sbr.rel (0) target = $region25
    $region24: #{_ffn_call.1} parent=1 // pred_region
      _
    $region25: #{_ffn_call.1} parent=1 // pred_fallthru
      _
    // Predicated region
    $region26: #{_ffn_call.1} parent=1 // pred_check
      _
    $region27: #{_ffn_call.1} parent=1 // pred_check_branch
      %26 = sbr.rel (0) target = $region29
    $region28: #{_ffn_call.1} parent=1 // pred_region
      _
    $region29: #{_ffn_call.1} parent=1 // pred_fallthru
      _
    %p28 = scmp.eq.s32.totalorder 0, 0
    // Predicated region
    $region30: #{_ffn_call.1} parent=1 // pred_check
      %p29 = pneg %p28
    $region31: #{_ffn_call.1} parent=1 // pred_check_branch
      %31 = sbr.rel (%p29) target = $region33
    $region32: #{_ffn_call.1} parent=1 // pred_region
      %v32 = vld [vmem:[%s0] sm:$0xff]
      %v33 = vld [vmem:[%s0 + $0x8] sm:$0xff]
      %vm34 = vcmask 261120
      %v35 = vsel %vm34, %v32, 0.0
      %36 = vadd.xlane.f32.xlu0 %v35
      %v37 = vpop.xlane.xlu0 %36
      %v38 = vsel %vm34, %v33, 0.0
      %39 = vadd.xlane.f32.xlu0 %v38
      %v40 = vpop.xlane.xlu0 %39
      %v41 = vmul.f32 %v37, 0.03125
      %v42 = vmul.f32 %v40, 0.03125
      %v43 = vmul.f32 %v32, %v32
      %v44 = vmul.f32 %v33, %v33
      %v45 = vsel %vm34, %v43, 0.0
      %46 = vadd.xlane.f32.xlu0 %v45
      %v47 = vpop.xlane.xlu0 %46
      %v48 = vsel %vm34, %v44, 0.0
      %49 = vadd.xlane.f32.xlu0 %v48
      %v50 = vpop.xlane.xlu0 %49
      %v51 = vmul.f32 %v47, 0.03125
      %v52 = vmul.f32 %v50, 0.03125
      %v53 = vmul.f32 %v41, %v41
      %v54 = vmul.f32 %v42, %v42
      %v55 = vsub.f32 %v51, %v53
      %v56 = vsub.f32 %v52, %v54
      %v57 = vmax.f32 %v55, 0.0
      %v58 = vmax.f32 %v56, 0.0
      %v59 = vsub.f32 %v32, %v41
      %v60 = vsub.f32 %v33, %v42
      %v61 = vadd.f32 %v57, 1e-05
      %v62 = vadd.f32 %v58, 1e-05
      %v63 = vrsqrt.pop %v61
      %v64 = vrsqrt.pop %v62
      %v65 = vmul.f32 %v59, %v63
      %v66 = vmul.f32 %v60, %v64
      %v67 = vld [vmem:[%s1] sm:$0x1]
      %v69 = vlaneseq
      %v70 = vshrl.u32 %v69, 7
      %v71 = vsub.s32 0, %v70
      %v72 = vrot.slane %v67, %v71
      %v74 = vmul.f32 %v65, %v72
      %v75 = vmul.f32 %v66, %v72
      %v76 = vld [vmem:[%s2] sm:$0x1]
      %v78 = vlaneseq
      %v79 = vshrl.u32 %v78, 7
      %v80 = vsub.s32 0, %v79
      %v81 = vrot.slane %v76, %v80
      %v83 = vadd.f32 %v74, %v81
      %v84 = vadd.f32 %v75, %v81
      %v85 = vpack.c.bf16 %v84, %v83
      %86 = vst.msk [vmem:[#allocation2] sm:$0xff] %vm34, %v85
      %87 = vst.msk [vmem:[#allocation3] sm:$0xff] %vm34, 0.0
      %88 = vst.msk [vmem:[#allocation3 + $0x8] sm:$0xff] %vm34, 0.0
    $region33: #{_ffn_call.1} parent=1 // pred_fallthru
      _
    %v89 = vld [vmem:[#allocation2] sm:$0xff]
    %v90 = vld [vmem:[%s3] sm:$0xf]
    %v91 = vld [vmem:[%s3 + $0x4] sm:$0xf]
    %v92 = vld [vmem:[%s3 + $0x8] sm:$0xf]
    %v93 = vld [vmem:[%s3 + $0xc] sm:$0xf]
    %v94 = vld [vmem:[%s4] sm:$0x1]
    %v96 = vlaneseq
    %v97 = vshrl.u32 %v96, 7
    %v98 = vsub.s32 0, %v97
    %v99 = vrot.slane %v94, %v98
    %v105 = vunpack.c.l.b16 %v90
    %v106 = vunpack.c.l.b16 %v91
    %v107 = vunpack.c.l.b16 %v92
    %v108 = vunpack.c.l.b16 %v93
    %v109 = vpack.c.b16 %v106, %v105
    %v110 = vpack.c.b16 %v108, %v107
    %vm113 = vcmask 261120
    %v115 = vsel %vm113, %v89, 0
    %117 = vmatprep.subr.bf16.mxu0 0
    %118 = vmatpush1.bf16.msra.mxu0 %v109
    %119 = vmatprep.subr.bf16.mxu0 0
    %120 = vmatpush1.bf16.msra.mxu0 %v110
    %121 = vmatprep.subr.bf16.mxu0 0
    %122 = vmatpush1.bf16.msra.mxu0 0
    %123 = vmatprep.subr.bf16.mxu0 0
    %124 = vmatpush1.bf16.msra.mxu0 0
    %125 = vmatprep.subr.bf16.mxu0 0
    %126 = vmatpush1.bf16.msra.mxu0 0
    %127 = vmatprep.subr.bf16.mxu0 0
    %128 = vmatpush1.bf16.msra.mxu0 0
    %129 = vmatprep.subr.bf16.mxu0 0
    %130 = vmatpush1.bf16.msra.mxu0 0
    %131 = vmatprep.subr.bf16.mxu0 0
    %132 = vmatpush1.bf16.msra.mxu0 0
    %133 = vmatprep.subr.bf16.mxu0 0
    %134 = vmatpush1.bf16.msra.mxu0 0
    %135 = vmatprep.subr.bf16.mxu0 0
    %136 = vmatpush1.bf16.msra.mxu0 0
    %137 = vmatprep.subr.bf16.mxu0 0
    %138 = vmatpush1.bf16.msra.mxu0 0
    %139 = vmatprep.subr.bf16.mxu0 0
    %140 = vmatpush1.bf16.msra.mxu0 0
    %141 = vmatprep.subr.bf16.mxu0 0
    %142 = vmatpush1.bf16.msra.mxu0 0
    %143 = vmatprep.subr.bf16.mxu0 0
    %144 = vmatpush1.bf16.msra.mxu0 0
    %145 = vmatprep.subr.bf16.mxu0 0
    %146 = vmatpush1.bf16.msra.mxu0 0
    %147 = vmatprep.subr.bf16.mxu0 0
    %148 = vmatpush1.bf16.msra.mxu0 0
    %149 = vmatprep.mubr.bf16.mxu0 0
    %150 = vmatmul.mubr.bf16.gmra.mrb[0].mxu0 %v115
    %v151 = vpop.f32.mrb[0].mxu0
    %v152 = vadd.f32 %v99, %v151
    %v153 = vpop.f32.mrb[0].mxu0
    %v154 = vpop.f32.mrb[0].mxu0
    %v155 = vadd.f32 %v99, %v154
    %v156 = vpop.f32.mrb[0].mxu0
    %157 = vdwg.mxu0
    %v158 = vmul.f32 %v152, 0.5
    %v159 = vmul.f32 %v155, 0.5
    %v160 = vmul.f32 %v152, 0.70710677
    %v161 = vmul.f32 %v155, 0.70710677
    %vm162 = vcmp.ge.f32.partialorder %v160, 0.0
    %vm163 = vcmp.ge.f32.partialorder %v161, 0.0
    %v164 = vsel %vm162, 1.0, -1.0
    %v165 = vsel %vm163, 1.0, -1.0
    %v166 = vand.u32 2147483647, %v160
    %v167 = vand.u32 2147483647, %v161
    %v168 = vmul.f32 %v166, 0.3275911
    %v169 = vmul.f32 %v167, 0.3275911
    %v170 = vadd.f32 %v168, 1.0
    %v171 = vadd.f32 %v169, 1.0
    %v172 = vrcp.pop %v170
    %v173 = vrcp.pop %v171
    %v174 = vmul.f32 %v172, 1.0614054
    %v175 = vmul.f32 %v173, 1.0614054
    %v176 = vadd.f32 %v174, -1.4531521
    %v177 = vadd.f32 %v175, -1.4531521
    %v178 = vmul.f32 %v176, %v172
    %v179 = vmul.f32 %v177, %v173
    %v180 = vadd.f32 %v178, 1.4214138
    %v181 = vadd.f32 %v179, 1.4214138
    %v182 = vmul.f32 %v180, %v172
    %v183 = vmul.f32 %v181, %v173
    %v184 = vadd.f32 %v182, -0.28449672
    %v185 = vadd.f32 %v183, -0.28449672
    %v186 = vmul.f32 %v184, %v172
    %v187 = vmul.f32 %v185, %v173
    %v188 = vadd.f32 %v186, 0.2548296
    %v189 = vadd.f32 %v187, 0.2548296
    %v190 = vmul.f32 %v188, %v172
    %v191 = vmul.f32 %v189, %v173
    %v192 = vsub.f32 0.0, %v166
    %v193 = vsub.f32 0.0, %v167
    %v194 = vmul.f32 %v192, %v166
    %v195 = vmul.f32 %v193, %v167
    %v196 = vmul.f32 %v194, 1.442695
    %v197 = vpow.pop %v196
    %v198 = vmul.f32 %v195, 1.442695
    %v199 = vpow.pop %v198
    %v200 = vmul.f32 %v190, %v197
    %v201 = vmul.f32 %v191, %v199
    %v202 = vsub.f32 1.0, %v200
    %v203 = vsub.f32 1.0, %v201
    %v204 = vmul.f32 %v164, %v202
    %v205 = vmul.f32 %v165, %v203
    %v206 = vadd.f32 %v204, 1.0
    %v207 = vadd.f32 %v205, 1.0
    %v208 = vmul.f32 %v158, %v206
    %v209 = vmul.f32 %v159, %v207
    %v210 = vld [vmem:[#allocation3] sm:$0xff]
    %v211 = vld [vmem:[#allocation3 + $0x8] sm:$0xff]
    %v212 = vpack.c.bf16 %v209, %v208
    %v213 = vld [vmem:[%s5] sm:$0xf]
    %v214 = vld [vmem:[%s5 + $0x4] sm:$0xf]
    %v215 = vld [vmem:[%s5 + $0x8] sm:$0xf]
    %v216 = vld [vmem:[%s5 + $0xc] sm:$0xf]
    %v217 = vld [vmem:[%s5 + $0x10] sm:$0xf]
    %v218 = vld [vmem:[%s5 + $0x14] sm:$0xf]
    %v219 = vld [vmem:[%s5 + $0x18] sm:$0xf]
    %v220 = vld [vmem:[%s5 + $0x1c] sm:$0xf]
    %v229 = vunpack.c.l.b16 %v213
    %v230 = vunpack.c.l.b16 %v214
    %v231 = vunpack.c.l.b16 %v215
    %v232 = vunpack.c.l.b16 %v216
    %v233 = vunpack.c.l.b16 %v217
    %v234 = vunpack.c.l.b16 %v218
    %v235 = vunpack.c.l.b16 %v219
    %v236 = vunpack.c.l.b16 %v220
    %v237 = vpack.c.b16 %v230, %v229
    %v238 = vpack.c.b16 %v232, %v231
    %v239 = vpack.c.b16 %v234, %v233
    %v240 = vpack.c.b16 %v236, %v235
    %vm245 = vcmask 523264
    %v247 = vsel %vm245, %v212, 0
    %249 = vmatprep.subr.bf16.mxu0 0
    %250 = vmatpush1.bf16.msra.mxu0 %v237
    %251 = vmatprep.subr.bf16.mxu0 0
    %252 = vmatpush1.bf16.msra.mxu0 %v238
    %253 = vmatprep.subr.bf16.mxu0 0
    %254 = vmatpush1.bf16.msra.mxu0 %v239
    %255 = vmatprep.subr.bf16.mxu0 0
    %256 = vmatpush1.bf16.msra.mxu0 %v240
    %257 = vmatprep.subr.bf16.mxu0 0
    %258 = vmatpush1.bf16.msra.mxu0 0
    %259 = vmatprep.subr.bf16.mxu0 0
    %260 = vmatpush1.bf16.msra.mxu0 0
    %261 = vmatprep.subr.bf16.mxu0 0
    %262 = vmatpush1.bf16.msra.mxu0 0
    %263 = vmatprep.subr.bf16.mxu0 0
    %264 = vmatpush1.bf16.msra.mxu0 0
    %265 = vmatprep.subr.bf16.mxu0 0
    %266 = vmatpush1.bf16.msra.mxu0 0
    %267 = vmatprep.subr.bf16.mxu0 0
    %268 = vmatpush1.bf16.msra.mxu0 0
    %269 = vmatprep.subr.bf16.mxu0 0
    %270 = vmatpush1.bf16.msra.mxu0 0
    %271 = vmatprep.subr.bf16.mxu0 0
    %272 = vmatpush1.bf16.msra.mxu0 0
    %273 = vmatprep.subr.bf16.mxu0 0
    %274 = vmatpush1.bf16.msra.mxu0 0
    %275 = vmatprep.subr.bf16.mxu0 0
    %276 = vmatpush1.bf16.msra.mxu0 0
    %277 = vmatprep.subr.bf16.mxu0 0
    %278 = vmatpush1.bf16.msra.mxu0 0
    %279 = vmatprep.subr.bf16.mxu0 0
    %280 = vmatpush1.bf16.msra.mxu0 0
    %281 = vmatprep.mubr.bf16.mxu0 0
    %282 = vmatmul.mubr.bf16.gmra.mrb[0].mxu0 %v247
    %v283 = vpop.f32.mrb[0].mxu0
    %v284 = vadd.f32 0.0, %v283
    %v285 = vpop.f32.mrb[0].mxu0
    %v286 = vpop.f32.mrb[0].mxu0
    %v287 = vadd.f32 0.0, %v286
    %v288 = vpop.f32.mrb[0].mxu0
    %289 = vdwg.mxu0
    %v290 = vadd.f32 %v210, %v284
    %v291 = vadd.f32 %v211, %v287
    %292 = vst.msk [vmem:[#allocation3] sm:$0xff] %vm113, %v290
    %293 = vst.msk [vmem:[#allocation3 + $0x8] sm:$0xff] %vm113, %v291
    // Predicated region
    $region34: #{_ffn_call.1} parent=1 // pred_check
      %p294 = pneg %p28
    $region35: #{_ffn_call.1} parent=1 // pred_check_branch
      %296 = sbr.rel (%p294) target = $region37
    $region36: #{_ffn_call.1} parent=1 // pred_region
      %v297 = vld [vmem:[#allocation3] sm:$0xff]
      %v298 = vld [vmem:[#allocation3 + $0x8] sm:$0xff]
      %v299 = vld [vmem:[%s6] sm:$0x1]
      %v301 = vlaneseq
      %v302 = vshrl.u32 %v301, 7
      %v303 = vsub.s32 0, %v302
      %v304 = vrot.slane %v299, %v303
      %v306 = vadd.f32 %v297, %v304
      %v307 = vadd.f32 %v298, %v304
      %308 = vst.msk [vmem:[#allocation4] sm:$0xff] %vm113, %v306
      %309 = vst.msk [vmem:[#allocation4 + $0x8] sm:$0xff] %vm113, %v307
    $region37: #{_ffn_call.1} parent=1 // pred_fallthru
      _
    // Predicated region
    $region38: #{_ffn_call.1} parent=1 // pred_check
      _
    $region39: #{_ffn_call.1} parent=1 // pred_check_branch
      %311 = sbr.rel (0) target = $region41
    $region40: #{_ffn_call.1} parent=1 // pred_region
      %s313 = ssub.s32 256, 256
      %314 = vsyncadd [#allocation5], %s313
      %s315 = sshll.u32 [#allocation4], 4
      %s316 = int_to_ptr.vmem [resolvable:$true] %s315
      %321 = dma.vmem_to_hbm [thread:$0]  %s316, 256, %s7, [#allocation5], 128, 128, 8
    $region41: #{_ffn_call.1} parent=1 // pred_fallthru
      _
    // Predicated region
    $region42: #{_ffn_call.1} parent=1 // pred_check
      _
    $region43: #{_ffn_call.1} parent=1 // pred_check_branch
      %323 = sbr.rel (0) target = $region45
    $region44: #{_ffn_call.1} parent=1 // pred_region
      %324 = dma.done [#allocation5], 256
    $region45: #{_ffn_call.1} parent=1 // pred_fallthru
      _
    %325 = vsyncpa [#allocation5], 1

</llo_original>
